<compile_context>
chip_gen: v7x
topology: tpu7x:2x2x1
jax: 0.10.0
libtpu: 0.0.40
codegen_flags: <defaults>
</compile_context>

<pallas_src>
import functools

import jax
import jax.numpy as jnp
from jax.experimental import pallas as pl
from jax.experimental.pallas import tpu as pltpu


def _round_up(n, m):
    return -(-n // m) * m


# ----------------------------------------------------------------------------
# Kernel
# ----------------------------------------------------------------------------
def _ppg_fused_kernel(obs_ref, w_rep_ref, b_rep_ref, w_hid_ref, b_hid_ref,
                      w_head_ref, b_head_ref, out_ref, *, rep_dim):
    """One batch tile of the full PPG forward.

    Output slab layout (last dim is a multiple of 128 lanes):
        [ actor_state (rep_dim) | logits (action_dim) | value | aux | 0-pad ]
    """
    obs = obs_ref[...]                                       # bf16 (TB, obs_dim)

    # One MXU pass for all three representation towers: rep = [sa | sc | sx].
    rep = jnp.maximum(
        jnp.dot(obs, w_rep_ref[...], preferred_element_type=jnp.float32)
        + b_rep_ref[...], 0.0)                               # f32 (TB, 3*rep_dim)

    # One block-diagonal MXU pass for the three hidden layers: [ha | hc | hx].
    hid = jnp.maximum(
        jnp.dot(rep.astype(jnp.bfloat16), w_hid_ref[...],
                preferred_element_type=jnp.float32)
        + b_hid_ref[...], 0.0)                               # f32 (TB, ah+2*ch)

    # One block-diagonal MXU pass for the three heads, zero-padded host-side to
    # (out_w - rep_dim) columns so the concatenated store below is a full-width
    # unmasked store and a dense writeback DMA.
    heads = (jnp.dot(hid.astype(jnp.bfloat16), w_head_ref[...],
                     preferred_element_type=jnp.float32)
             + b_head_ref[...])                              # f32 (TB, out_w-rep_dim)

    out_ref[...] = jnp.concatenate([rep[:, :rep_dim], heads], axis=-1)


# ----------------------------------------------------------------------------
# Host-side parameter fusion (call ONCE per parameter update, not per step)
# ----------------------------------------------------------------------------
def fuse_params(p):
    """Fuse the 18 per-tower tensors into 3 bf16 weight / f32 bias pairs plus
    static layout metadata."""
    obs_dim, rep_dim = p["wra"].shape
    action_dim = p["wa2"].shape[1]
    head_raw = action_dim + 2                       # [logits | value | aux]
    out_w = _round_up(rep_dim + head_raw, 128)      # lane-dense output slab
    head_pad_w = out_w - rep_dim                    # zero-padded head width

    w_rep = jnp.concatenate([p["wra"], p["wrc"], p["wrx"]], axis=1)   # (obs, 3r)
    b_rep = jnp.concatenate([p["bra"], p["brc"], p["brx"]], axis=1)   # (1, 3r)
    # NOTE: block-diag fusion is exact (cross blocks are structural zeros) but
    # costs 3x MXU FLOPs / weight bytes; fine at these small widths.  For
    # rep/hidden >= ~256, switch the hid/head stages to per-tower dots.
    w_hid = jax.scipy.linalg.block_diag(p["wa1"], p["wc1"], p["wx1"])  # (3r, ah+2ch)
    b_hid = jnp.concatenate([p["ba1"], p["bc1"], p["bx1"]], axis=1)
    w_head = jax.scipy.linalg.block_diag(p["wa2"], p["wc2"], p["wx2"])  # (ah+2ch, act+2)
    b_head = jnp.concatenate([p["ba2"], p["bc2"], p["bx2"]], axis=1)
    w_head = jnp.pad(w_head, ((0, 0), (0, head_pad_w - head_raw)))
    b_head = jnp.pad(b_head, ((0, 0), (0, head_pad_w - head_raw)))

    return {
        # weight streams in bf16 (MXU-native); biases stay f32
        "w_rep": w_rep.astype(jnp.bfloat16), "b_rep": b_rep,
        "w_hid": w_hid.astype(jnp.bfloat16), "b_hid": b_hid,
        "w_head": w_head.astype(jnp.bfloat16), "b_head": b_head,
        # static layout metadata (Python ints)
        "obs_dim": int(obs_dim), "rep_dim": int(rep_dim),
        "action_dim": int(action_dim), "out_w": int(out_w),
    }


def _padded_vmem_bytes(shape, dtype):
    """VMEM footprint of a 2-D tile after sublane/lane padding."""
    itemsize = jnp.dtype(dtype).itemsize
    sub = {4: 8, 2: 16, 1: 32}[itemsize]
    rows = _round_up(int(shape[0]), sub)
    cols = _round_up(int(shape[1]), 128)
    return rows * cols * itemsize


# ----------------------------------------------------------------------------
# Forward wrapper
# ----------------------------------------------------------------------------
def ppg_actor_critic_forward(obs, fused):
    """Full PPGActorCritic forward in one Pallas call.

    Returns (policy_outputs, logits, value, aux_value); the Categorical
    distribution a_dist is fully parameterized by `logits`.
    """
    B, obs_dim = obs.shape
    assert obs_dim == fused["obs_dim"]
    rep_dim = fused["rep_dim"]
    action_dim = fused["action_dim"]
    out_w = fused["out_w"]

    # Batch tiling: big tiles amortize the ~0.35us per-grid-step overhead; cap
    # at ceil(B/2) (rounded to 8 sublanes) so the "parallel" batch axis has
    # >= 2 steps for v7x's two TensorCores, and cap at 1024 rows to bound VMEM.
    TB = min(1024, max(8, _round_up(pl.cdiv(B, 2), 8)))
    B_pad = _round_up(B, TB)
    grid = (B_pad // TB,)

    obs_p = obs if B_pad == B else jnp.pad(obs, ((0, B_pad - B), (0, 0)))
    obs_p = obs_p.astype(jnp.bfloat16)

    weight_keys = ("w_rep", "b_rep", "w_hid", "b_hid", "w_head", "b_head")
    weights = [fused[k] for k in weight_keys]

    # Explicit VMEM budget: double-buffered obs/out tiles + (double-buffered,
    # even though index_map is constant) weights, all lane/sublane padded.
    vmem_est = 2 * (_padded_vmem_bytes((TB, obs_dim), jnp.bfloat16)
                    + _padded_vmem_bytes((TB, out_w), jnp.float32)
                    + sum(_padded_vmem_bytes(w.shape, w.dtype) for w in weights))
    vmem_limit = int(min(64 << 20, max(vmem_est + (4 << 20), 16 << 20)))

    rep_w = fused["w_rep"].shape[1]
    hid_w = fused["w_hid"].shape[1]
    head_w = fused["w_head"].shape[1]
    flops = 2 * B_pad * (obs_dim * rep_w + rep_w * hid_w + hid_w * head_w)
    bytes_accessed = (int(obs_p.size) * 2
                      + sum(int(w.size) * jnp.dtype(w.dtype).itemsize for w in weights)
                      + B_pad * out_w * 4)
    cost = pl.CostEstimate(flops=flops, transcendentals=0,
                           bytes_accessed=int(bytes_accessed))

    resident = lambda i: (0, 0)   # weights stay VMEM-resident across the grid
    batched = lambda i: (i, 0)    # obs / output stream along the batch axis

    out = pl.pallas_call(
        functools.partial(_ppg_fused_kernel, rep_dim=rep_dim),
        grid=grid,
        in_specs=[pl.BlockSpec((TB, obs_dim), batched)]
                 + [pl.BlockSpec(w.shape, resident) for w in weights],
        out_specs=pl.BlockSpec((TB, out_w), batched),
        out_shape=jax.ShapeDtypeStruct((B_pad, out_w), jnp.float32),
        compiler_params=pltpu.CompilerParams(
            dimension_semantics=("parallel",),
            vmem_limit_bytes=vmem_limit),
        cost_estimate=cost,
    )(obs_p, *weights)

    out = out[:B]
    policy_outputs = {"state": out[:, :rep_dim]}
    logits = out[:, rep_dim:rep_dim + action_dim]
    value = out[:, rep_dim + action_dim]           # == CriticNet(sc)[:, 0]
    aux_value = out[:, rep_dim + action_dim + 1]   # == AuxCriticNet(sx)[:, 0]
    return policy_outputs, logits, value, aux_value


# ----------------------------------------------------------------------------
# Synthetic parameters + references
# ----------------------------------------------------------------------------
def init_params(key, obs_dim, rep_dim, actor_hidden, critic_hidden, action_dim):
    """Deterministic synthetic parameter init (shapes follow the module's __init__)."""
    ks = jax.random.split(key, 18)

    def lin(k, fan_in, fan_out):
        scale = 1.0 / jnp.sqrt(jnp.float32(fan_in))
        return jax.random.uniform(k, (fan_in, fan_out), jnp.float32, -scale, scale)

    def bias(k, fan_in, fan_out):
        scale = 1.0 / jnp.sqrt(jnp.float32(fan_in))
        return jax.random.uniform(k, (1, fan_out), jnp.float32, -scale, scale)

    return {
        # three independent representation towers (actor / critic / aux_critic)
        "wra": lin(ks[0], obs_dim, rep_dim),  "bra": bias(ks[1], obs_dim, rep_dim),
        "wrc": lin(ks[2], obs_dim, rep_dim),  "brc": bias(ks[3], obs_dim, rep_dim),
        "wrx": lin(ks[4], obs_dim, rep_dim),  "brx": bias(ks[5], obs_dim, rep_dim),
        # ActorNet
        "wa1": lin(ks[6], rep_dim, actor_hidden),    "ba1": bias(ks[7], rep_dim, actor_hidden),
        "wa2": lin(ks[8], actor_hidden, action_dim), "ba2": bias(ks[9], actor_hidden, action_dim),
        # CriticNet
        "wc1": lin(ks[10], rep_dim, critic_hidden), "bc1": bias(ks[11], rep_dim, critic_hidden),
        "wc2": lin(ks[12], critic_hidden, 1),       "bc2": bias(ks[13], critic_hidden, 1),
        # Aux CriticNet
        "wx1": lin(ks[14], rep_dim, critic_hidden), "bx1": bias(ks[15], rep_dim, critic_hidden),
        "wx2": lin(ks[16], critic_hidden, 1),       "bx2": bias(ks[17], critic_hidden, 1),
    }


def _reference_f32(obs, p):
    """Exact f32 module semantics."""
    relu = lambda x: jnp.maximum(x, 0.0)
    sa = relu(obs @ p["wra"] + p["bra"])
    sc = relu(obs @ p["wrc"] + p["brc"])
    sx = relu(obs @ p["wrx"] + p["brx"])
    logits = relu(sa @ p["wa1"] + p["ba1"]) @ p["wa2"] + p["ba2"]
    value = relu(sc @ p["wc1"] + p["bc1"]) @ p["wc2"] + p["bc2"]
    aux = relu(sx @ p["wx1"] + p["bx1"]) @ p["wx2"] + p["bx2"]
    return sa, logits, value[:, 0], aux[:, 0]


def _reference_bf16(obs, p):
    """Pure-JAX reference with the kernel's bf16-input / f32-accumulate dots."""
    bf = jnp.bfloat16
    d = lambda a, b: jnp.dot(a.astype(bf), b.astype(bf),
                             preferred_element_type=jnp.float32)
    relu = lambda x: jnp.maximum(x, 0.0)
    sa = relu(d(obs, p["wra"]) + p["bra"])
    sc = relu(d(obs, p["wrc"]) + p["brc"])
    sx = relu(d(obs, p["wrx"]) + p["brx"])
    logits = d(relu(d(sa, p["wa1"]) + p["ba1"]), p["wa2"]) + p["ba2"]
    value = d(relu(d(sc, p["wc1"]) + p["bc1"]), p["wc2"]) + p["bc2"]
    aux = d(relu(d(sx, p["wx1"]) + p["bx1"]), p["wx2"]) + p["bx2"]
    return sa, logits, value[:, 0], aux[:, 0]


if __name__ == "__main__":
    key = jax.random.PRNGKey(0)
    k_obs, k_par = jax.random.split(key)

    # small, module-consistent shapes
    B, OBS_DIM, REP_DIM = 8, 16, 32
    ACTOR_HIDDEN, CRITIC_HIDDEN, ACTION_DIM = 32, 32, 4

    obs = jax.random.normal(k_obs, (B, OBS_DIM), dtype=jnp.float32)
    params = init_params(k_par, OBS_DIM, REP_DIM, ACTOR_HIDDEN, CRITIC_HIDDEN, ACTION_DIM)

    # Fuse/pad/cast weights ONCE, outside the hot per-step forward path.
    fused = fuse_params(params)

    policy_outputs, logits, value, aux_value = ppg_actor_critic_forward(obs, fused)
    jax.block_until_ready((policy_outputs["state"], logits, value, aux_value))

    # tight check vs a bf16-emulating pure-JAX reference (same quantization)
    bs, bl, bv, bx = _reference_bf16(obs, params)
    assert jnp.allclose(policy_outputs["state"], bs, atol=1e-4, rtol=1e-4)
    assert jnp.allclose(logits, bl, atol=1e-4, rtol=1e-4)
    assert jnp.allclose(value, bv, atol=1e-4, rtol=1e-4)
    assert jnp.allclose(aux_value, bx, atol=1e-4, rtol=1e-4)

    # coarse check vs the exact f32 module semantics (bf16 streams only)
    fs, fl, fv, fx = _reference_f32(obs, params)
    assert jnp.allclose(policy_outputs["state"], fs, atol=5e-2, rtol=5e-2)
    assert jnp.allclose(logits, fl, atol=5e-2, rtol=5e-2)
    assert jnp.allclose(value, fv, atol=5e-2, rtol=5e-2)
    assert jnp.allclose(aux_value, fx, atol=5e-2, rtol=5e-2)

    assert policy_outputs["state"].shape == (B, REP_DIM)
    assert logits.shape == (B, ACTION_DIM)
    assert value.shape == (B,) and aux_value.shape == (B,)

    print("KERNEL_OK")
</pallas_src>

<mosaic_0001>
module attributes {stable_mosaic.version = 11 : i64} {
  func.func @_ppg_fused_kernel(%arg0: i32, %arg1: memref<8x16xbf16, #tpu.memory_space<vmem>>, %arg2: memref<16x96xbf16, #tpu.memory_space<vmem>>, %arg3: memref<1x96xf32, #tpu.memory_space<vmem>>, %arg4: memref<96x96xbf16, #tpu.memory_space<vmem>>, %arg5: memref<1x96xf32, #tpu.memory_space<vmem>>, %arg6: memref<96x96xbf16, #tpu.memory_space<vmem>>, %arg7: memref<1x96xf32, #tpu.memory_space<vmem>>, %arg8: memref<8x128xf32, #tpu.memory_space<vmem>>) attributes {dimension_semantics = [#tpu.dimension_semantics<parallel>], iteration_bounds = array<i64: 1>, scalar_prefetch = 0 : i64, scratch_operands = 0 : i64, tpu.core_type = #tpu.core_type<tc>, window_params = [{transform_indices = @transform_0, window_bounds = array<i64: 8, 16>}, {pipeline_mode = #tpu.pipeline_mode<synchronous>, transform_indices = @transform_1, window_bounds = array<i64: 16, 96>}, {pipeline_mode = #tpu.pipeline_mode<synchronous>, transform_indices = @transform_2, window_bounds = array<i64: 1, 96>}, {pipeline_mode = #tpu.pipeline_mode<synchronous>, transform_indices = @transform_3, window_bounds = array<i64: 96, 96>}, {pipeline_mode = #tpu.pipeline_mode<synchronous>, transform_indices = @transform_4, window_bounds = array<i64: 1, 96>}, {pipeline_mode = #tpu.pipeline_mode<synchronous>, transform_indices = @transform_5, window_bounds = array<i64: 96, 96>}, {pipeline_mode = #tpu.pipeline_mode<synchronous>, transform_indices = @transform_6, window_bounds = array<i64: 1, 96>}, {transform_indices = @transform_7, window_bounds = array<i64: 8, 128>}]} {
    %c0 = arith.constant 0 : index
    %c0_0 = arith.constant 0 : index
    %0 = vector.load %arg1[%c0, %c0_0] : memref<8x16xbf16, #tpu.memory_space<vmem>>, vector<8x16xbf16>
    %c0_1 = arith.constant 0 : index
    %c0_2 = arith.constant 0 : index
    %1 = vector.load %arg2[%c0_1, %c0_2] : memref<16x96xbf16, #tpu.memory_space<vmem>>, vector<16x96xbf16>
    %cst = arith.constant dense<0.000000e+00> : vector<8x96xf32>
    %2 = tpu.matmul %0, %1, %cst {dimension_numbers = #tpu.dot_dimension_numbers<[1], [0], [0], [1], [0, 0, 1, 1], [], []>} : vector<8x16xbf16>, vector<16x96xbf16>, vector<8x96xf32> -> vector<8x96xf32>
    %c0_3 = arith.constant 0 : index
    %c0_4 = arith.constant 0 : index
    %3 = vector.load %arg3[%c0_3, %c0_4] : memref<1x96xf32, #tpu.memory_space<vmem>>, vector<1x96xf32>
    %4 = vector.broadcast %3 : vector<1x96xf32> to vector<8x96xf32>
    %5 = arith.addf %2, %4 : vector<8x96xf32>
    %cst_5 = arith.constant 0.000000e+00 : f32
    %6 = vector.broadcast %cst_5 : f32 to vector<8x96xf32>
    %7 = arith.maximumf %5, %6 : vector<8x96xf32>
    %8 = arith.truncf %7 : vector<8x96xf32> to vector<8x96xbf16>
    %c0_6 = arith.constant 0 : index
    %c0_7 = arith.constant 0 : index
    %9 = vector.load %arg4[%c0_6, %c0_7] : memref<96x96xbf16, #tpu.memory_space<vmem>>, vector<96x96xbf16>
    %cst_8 = arith.constant dense<0.000000e+00> : vector<8x96xf32>
    %10 = tpu.matmul %8, %9, %cst_8 {dimension_numbers = #tpu.dot_dimension_numbers<[1], [0], [0], [1], [0, 0, 1, 1], [], []>} : vector<8x96xbf16>, vector<96x96xbf16>, vector<8x96xf32> -> vector<8x96xf32>
    %c0_9 = arith.constant 0 : index
    %c0_10 = arith.constant 0 : index
    %11 = vector.load %arg5[%c0_9, %c0_10] : memref<1x96xf32, #tpu.memory_space<vmem>>, vector<1x96xf32>
    %12 = vector.broadcast %11 : vector<1x96xf32> to vector<8x96xf32>
    %13 = arith.addf %10, %12 : vector<8x96xf32>
    %cst_11 = arith.constant 0.000000e+00 : f32
    %14 = vector.broadcast %cst_11 : f32 to vector<8x96xf32>
    %15 = arith.maximumf %13, %14 : vector<8x96xf32>
    %16 = arith.truncf %15 : vector<8x96xf32> to vector<8x96xbf16>
    %c0_12 = arith.constant 0 : index
    %c0_13 = arith.constant 0 : index
    %17 = vector.load %arg6[%c0_12, %c0_13] : memref<96x96xbf16, #tpu.memory_space<vmem>>, vector<96x96xbf16>
    %cst_14 = arith.constant dense<0.000000e+00> : vector<8x96xf32>
    %18 = tpu.matmul %16, %17, %cst_14 {dimension_numbers = #tpu.dot_dimension_numbers<[1], [0], [0], [1], [0, 0, 1, 1], [], []>} : vector<8x96xbf16>, vector<96x96xbf16>, vector<8x96xf32> -> vector<8x96xf32>
    %c0_15 = arith.constant 0 : index
    %c0_16 = arith.constant 0 : index
    %19 = vector.load %arg7[%c0_15, %c0_16] : memref<1x96xf32, #tpu.memory_space<vmem>>, vector<1x96xf32>
    %20 = vector.broadcast %19 : vector<1x96xf32> to vector<8x96xf32>
    %21 = arith.addf %18, %20 : vector<8x96xf32>
    %22 = vector.extract_strided_slice %7 {offsets = [0, 0], sizes = [8, 32], strides = [1, 1]} : vector<8x96xf32> to vector<8x32xf32>
    %23 = tpu.concatenate %22, %21 in 1 : vector<8x32xf32>, vector<8x96xf32> -> vector<8x128xf32>
    %c0_17 = arith.constant 0 : index
    %c0_18 = arith.constant 0 : index
    %24 = vector.load %arg8[%c0_17, %c0_18] : memref<8x128xf32, #tpu.memory_space<vmem>>, vector<8x128xf32>
    tpu.vector_store %arg8[%c0_17, %c0_18], %23 {strides = array<i32>} : memref<8x128xf32, #tpu.memory_space<vmem>>, vector<8x128xf32>,
    return
  }
  func.func @transform_0(%arg0: i32) -> (i32, i32) {
    %c0_i32 = arith.constant 0 : i32
    %c0_i32_0 = arith.constant 0 : i32
    return %arg0, %c0_i32 : i32, i32
  }
  func.func @transform_1(%arg0: i32) -> (i32, i32) {
    %c0_i32 = arith.constant 0 : i32
    %c0_i32_0 = arith.constant 0 : i32
    %c0_i32_1 = arith.constant 0 : i32
    return %c0_i32, %c0_i32_0 : i32, i32
  }
  func.func @transform_2(%arg0: i32) -> (i32, i32) {
    %c0_i32 = arith.constant 0 : i32
    %c0_i32_0 = arith.constant 0 : i32
    %c0_i32_1 = arith.constant 0 : i32
    return %c0_i32, %c0_i32_0 : i32, i32
  }
  func.func @transform_3(%arg0: i32) -> (i32, i32) {
    %c0_i32 = arith.constant 0 : i32
    %c0_i32_0 = arith.constant 0 : i32
    %c0_i32_1 = arith.constant 0 : i32
    return %c0_i32, %c0_i32_0 : i32, i32
  }
  func.func @transform_4(%arg0: i32) -> (i32, i32) {
    %c0_i32 = arith.constant 0 : i32
    %c0_i32_0 = arith.constant 0 : i32
    %c0_i32_1 = arith.constant 0 : i32
    return %c0_i32, %c0_i32_0 : i32, i32
  }
  func.func @transform_5(%arg0: i32) -> (i32, i32) {
    %c0_i32 = arith.constant 0 : i32
    %c0_i32_0 = arith.constant 0 : i32
    %c0_i32_1 = arith.constant 0 : i32
    return %c0_i32, %c0_i32_0 : i32, i32
  }
  func.func @transform_6(%arg0: i32) -> (i32, i32) {
    %c0_i32 = arith.constant 0 : i32
    %c0_i32_0 = arith.constant 0 : i32
    %c0_i32_1 = arith.constant 0 : i32
    return %c0_i32, %c0_i32_0 : i32, i32
  }
  func.func @transform_7(%arg0: i32) -> (i32, i32) {
    %c0_i32 = arith.constant 0 : i32
    %c0_i32_0 = arith.constant 0 : i32
    return %arg0, %c0_i32 : i32, i32
  }
}

</mosaic_0001>

<llo_original>
// kernel: tpu_custom_call.1
$region0: #{tpu_custom_call.1}
  #allocation0 [shape = 'u32[]', space=smem, size = 0x4, offset = 0x4, fixed_abs, tag = 'smem constant byte address 0x4 - core index']
  #allocation1 [shape = 'u32[144,128]{1,0:T(1,128)}', space=vmem, size = 0x12000, scoped, tag = 'internal scratch']
  %s0 = inlined_call_operand.hbm [shape: bf16[8,16], index: 0, kind: input, shape index: {}]
  %s1 = inlined_call_operand.hbm [shape: bf16[16,96], index: 1, kind: input, shape index: {}]
  %s2 = inlined_call_operand.vmem [shape: f32[1,96], index: 2, kind: input, shape index: {}]
  %s3 = inlined_call_operand.hbm [shape: bf16[96,96], index: 3, kind: input, shape index: {}]
  %s4 = inlined_call_operand.vmem [shape: f32[1,96], index: 4, kind: input, shape index: {}]
  %s5 = inlined_call_operand.hbm [shape: bf16[96,96], index: 5, kind: input, shape index: {}]
  %s6 = inlined_call_operand.vmem [shape: f32[1,96], index: 6, kind: input, shape index: {}]
  %s7 = inlined_call_operand.hbm [shape: f32[8,128], index: 7, kind: output, shape index: {}]
  %s8 = sld [smem:[#allocation0]]
  $region54: #{tpu_custom_call.1} parent=0
    _
  %s10 = ssub.s32 1, %s8
  %s11 = scalar_select 0, %s10, %s8
  $region1: #{tpu_custom_call.1} parent=0
    #allocation2 [shape = 'u8[2048]{0}', space=vmem, size = 0x800, scoped, tag = 'input window, operand 0, single buffered']
    #allocation3 [shape = 's32[1]{0}', space=sflag, size = 0x4, scoped, tag = 'scoped memory for tpu_custom_call.1']
    #allocation4 [shape = 's32[1]{0}', space=sflag, size = 0x4, scoped, tag = 'scoped memory for tpu_custom_call.1']
    #allocation5 [shape = 'u8[4096]{0}', space=vmem, size = 0x1000, scoped, tag = 'input window, operand 1, single buffered']
    #allocation6 [shape = 's32[1]{0}', space=sflag, size = 0x4, scoped, tag = 'scoped memory for tpu_custom_call.1']
    #allocation7 [shape = 'u8[24576]{0}', space=vmem, size = 0x6000, scoped, tag = 'input window, operand 3, single buffered']
    #allocation8 [shape = 'u8[24576]{0}', space=vmem, size = 0x6000, scoped, tag = 'input window, operand 5, single buffered']
    #allocation9 [shape = 's32[1]{0}', space=sflag, size = 0x4, scoped, tag = 'scoped memory for tpu_custom_call.1']
    #allocation10 [shape = 'u8[4096]{0}', space=vmem, size = 0x1000, scoped, tag = 'output window, operand 0, single buffered']
    %12 = vsyncpa [#allocation3], 0
    %13 = vsyncpa [#allocation6], 0
    %14 = vsyncpa [#allocation9], 0
    %15 = vsyncpa [#allocation4], 0
    // Predicated region
    $region2: #{tpu_custom_call.1} parent=1 // pred_check
      _
    $region3: #{tpu_custom_call.1} parent=1 // pred_check_branch
      %17 = sbr.rel (0) target = $region5
    $region4: #{tpu_custom_call.1} parent=1 // pred_region
      %s19 = ssub.s32 64, 64
      %20 = vsyncadd [#allocation3], %s19
      %s22 = sshll.u32 [#allocation2], 4
      %s23 = int_to_ptr.vmem [resolvable:$true] %s22
      %25 = dma.hbm_to_vmem [thread:$0]  %s0, 64, %s23, [#allocation3]
    $region5: #{tpu_custom_call.1} parent=1 // pred_fallthru
      _
    // Predicated region
    $region6: #{tpu_custom_call.1} parent=1 // pred_check
      _
    $region7: #{tpu_custom_call.1} parent=1 // pred_check_branch
      %27 = sbr.rel (0) target = $region9
    $region8: #{tpu_custom_call.1} parent=1 // pred_region
      %s29 = ssub.s32 128, 128
      %30 = vsyncadd [#allocation6], %s29
      %s31 = sshll.u32 [#allocation5], 4
      %s32 = int_to_ptr.vmem [resolvable:$true] %s31
      %37 = dma.hbm_to_vmem [thread:$0]  %s1, 128, %s32, [#allocation6], 64, 64, 4
    $region9: #{tpu_custom_call.1} parent=1 // pred_fallthru
      _
    // Predicated region
    $region10: #{tpu_custom_call.1} parent=1 // pred_check
      _
    $region11: #{tpu_custom_call.1} parent=1 // pred_check_branch
      %39 = sbr.rel (0) target = $region13
    $region12: #{tpu_custom_call.1} parent=1 // pred_region
      _
    $region13: #{tpu_custom_call.1} parent=1 // pred_fallthru
      _
    // Predicated region
    $region14: #{tpu_custom_call.1} parent=1 // pred_check
      _
    $region15: #{tpu_custom_call.1} parent=1 // pred_check_branch
      %41 = sbr.rel (0) target = $region17
    $region16: #{tpu_custom_call.1} parent=1 // pred_region
      %s43 = ssub.s32 768, 768
      %44 = vsyncadd [#allocation6], %s43
      %s45 = sshll.u32 [#allocation7], 4
      %s46 = int_to_ptr.vmem [resolvable:$true] %s45
      %51 = dma.hbm_to_vmem [thread:$0]  %s3, 768, %s46, [#allocation6], 64, 64, 4
    $region17: #{tpu_custom_call.1} parent=1 // pred_fallthru
      _
    // Predicated region
    $region18: #{tpu_custom_call.1} parent=1 // pred_check
      _
    $region19: #{tpu_custom_call.1} parent=1 // pred_check_branch
      %53 = sbr.rel (0) target = $region21
    $region20: #{tpu_custom_call.1} parent=1 // pred_region
      _
    $region21: #{tpu_custom_call.1} parent=1 // pred_fallthru
      _
    // Predicated region
    $region22: #{tpu_custom_call.1} parent=1 // pred_check
      _
    $region23: #{tpu_custom_call.1} parent=1 // pred_check_branch
      %55 = sbr.rel (0) target = $region25
    $region24: #{tpu_custom_call.1} parent=1 // pred_region
      %s57 = ssub.s32 768, 768
      %58 = vsyncadd [#allocation9], %s57
      %s59 = sshll.u32 [#allocation8], 4
      %s60 = int_to_ptr.vmem [resolvable:$true] %s59
      %65 = dma.hbm_to_vmem [thread:$0]  %s5, 768, %s60, [#allocation9], 64, 64, 4
    $region25: #{tpu_custom_call.1} parent=1 // pred_fallthru
      _
    // Predicated region
    $region26: #{tpu_custom_call.1} parent=1 // pred_check
      _
    $region27: #{tpu_custom_call.1} parent=1 // pred_check_branch
      %67 = sbr.rel (0) target = $region29
    $region28: #{tpu_custom_call.1} parent=1 // pred_region
      _
    $region29: #{tpu_custom_call.1} parent=1 // pred_fallthru
      _
    // Predicated region
    $region30: #{tpu_custom_call.1} parent=1 // pred_check
      _
    $region31: #{tpu_custom_call.1} parent=1 // pred_check_branch
      %69 = sbr.rel (0) target = $region33
    $region32: #{tpu_custom_call.1} parent=1 // pred_region
      %70 = dma.done [#allocation3], 64
    $region33: #{tpu_custom_call.1} parent=1 // pred_fallthru
      _
    // Predicated region
    $region34: #{tpu_custom_call.1} parent=1 // pred_check
      _
    $region35: #{tpu_custom_call.1} parent=1 // pred_check_branch
      %72 = sbr.rel (0) target = $region37
    $region36: #{tpu_custom_call.1} parent=1 // pred_region
      %73 = dma.done [#allocation6], 128
    $region37: #{tpu_custom_call.1} parent=1 // pred_fallthru
      _
    // Predicated region
    $region38: #{tpu_custom_call.1} parent=1 // pred_check
      _
    $region39: #{tpu_custom_call.1} parent=1 // pred_check_branch
      %75 = sbr.rel (0) target = $region41
    $region40: #{tpu_custom_call.1} parent=1 // pred_region
      %76 = dma.done [#allocation6], 768
    $region41: #{tpu_custom_call.1} parent=1 // pred_fallthru
      _
    // Predicated region
    $region42: #{tpu_custom_call.1} parent=1 // pred_check
      _
    $region43: #{tpu_custom_call.1} parent=1 // pred_check_branch
      %78 = sbr.rel (0) target = $region45
    $region44: #{tpu_custom_call.1} parent=1 // pred_region
      %79 = dma.done [#allocation9], 768
    $region45: #{tpu_custom_call.1} parent=1 // pred_fallthru
      _
    %v81 = vld [vmem:[#allocation2] sm:$0xf]
    %v82 = vld [vmem:[#allocation5] sm:$0xf]
    %v83 = vld [vmem:[#allocation5 + $0x4] sm:$0xf]
    %v84 = vld [vmem:[%s2] sm:$0x1]
    %v86 = vlaneseq
    %v87 = vshrl.u32 %v86, 7
    %v88 = vsub.s32 0, %v87
    %v89 = vrot.slane %v84, %v88
    %v93 = vunpack.c.l.b16 %v82
    %v94 = vunpack.c.l.b16 %v83
    %v95 = vpack.c.b16 %v94, %v93
    %vm97 = vcmask 130048
    %v99 = vsel %vm97, %v81, 0
    %101 = vmatprep.subr.bf16.mxu0 0
    %102 = vmatpush1.bf16.msra.mxu0 %v95
    %103 = vmatprep.subr.bf16.mxu0 0
    %104 = vmatpush1.bf16.msra.mxu0 0
    %105 = vmatprep.subr.bf16.mxu0 0
    %106 = vmatpush1.bf16.msra.mxu0 0
    %107 = vmatprep.subr.bf16.mxu0 0
    %108 = vmatpush1.bf16.msra.mxu0 0
    %109 = vmatprep.subr.bf16.mxu0 0
    %110 = vmatpush1.bf16.msra.mxu0 0
    %111 = vmatprep.subr.bf16.mxu0 0
    %112 = vmatpush1.bf16.msra.mxu0 0
    %113 = vmatprep.subr.bf16.mxu0 0
    %114 = vmatpush1.bf16.msra.mxu0 0
    %115 = vmatprep.subr.bf16.mxu0 0
    %116 = vmatpush1.bf16.msra.mxu0 0
    %117 = vmatprep.subr.bf16.mxu0 0
    %118 = vmatpush1.bf16.msra.mxu0 0
    %119 = vmatprep.subr.bf16.mxu0 0
    %120 = vmatpush1.bf16.msra.mxu0 0
    %121 = vmatprep.subr.bf16.mxu0 0
    %122 = vmatpush1.bf16.msra.mxu0 0
    %123 = vmatprep.subr.bf16.mxu0 0
    %124 = vmatpush1.bf16.msra.mxu0 0
    %125 = vmatprep.subr.bf16.mxu0 0
    %126 = vmatpush1.bf16.msra.mxu0 0
    %127 = vmatprep.subr.bf16.mxu0 0
    %128 = vmatpush1.bf16.msra.mxu0 0
    %129 = vmatprep.subr.bf16.mxu0 0
    %130 = vmatpush1.bf16.msra.mxu0 0
    %131 = vmatprep.subr.bf16.mxu0 0
    %132 = vmatpush1.bf16.msra.mxu0 0
    %133 = vmatprep.mubr.bf16.mxu0 0
    %134 = vmatmul.mubr.bf16.gmra.mrb[0].mxu0 %v99
    %v135 = vpop.f32.mrb[0].mxu0
    %v136 = vadd.f32 %v89, %v135
    %v137 = vpop.f32.mrb[0].mxu0
    %v138 = vpop.f32.mrb[0].mxu0
    %v139 = vpop.f32.mrb[0].mxu0
    %140 = vdwg.mxu0
    %v141 = vmax.f32 %v136, 0.0
    %v142 = vpack.c.bf16 %v141, %v141
    %v143 = vld [vmem:[#allocation7] sm:$0xf]
    %v144 = vld [vmem:[#allocation7 + $0x4] sm:$0xf]
    %v145 = vld [vmem:[#allocation7 + $0x8] sm:$0xf]
    %v146 = vld [vmem:[#allocation7 + $0xc] sm:$0xf]
    %v147 = vld [vmem:[#allocation7 + $0x10] sm:$0xf]
    %v148 = vld [vmem:[#allocation7 + $0x14] sm:$0xf]
    %v149 = vld [vmem:[#allocation7 + $0x18] sm:$0xf]
    %v150 = vld [vmem:[#allocation7 + $0x1c] sm:$0xf]
    %v151 = vld [vmem:[#allocation7 + $0x20] sm:$0xf]
    %v152 = vld [vmem:[#allocation7 + $0x24] sm:$0xf]
    %v153 = vld [vmem:[#allocation7 + $0x28] sm:$0xf]
    %v154 = vld [vmem:[#allocation7 + $0x2c] sm:$0xf]
    %v155 = vld [vmem:[%s4] sm:$0x1]
    %v157 = vlaneseq
    %v158 = vshrl.u32 %v157, 7
    %v159 = vsub.s32 0, %v158
    %v160 = vrot.slane %v155, %v159
    %v174 = vunpack.c.l.b16 %v143
    %v175 = vunpack.c.l.b16 %v144
    %v176 = vunpack.c.l.b16 %v145
    %v177 = vunpack.c.l.b16 %v146
    %v178 = vunpack.c.l.b16 %v147
    %v179 = vunpack.c.l.b16 %v148
    %v180 = vunpack.c.l.b16 %v149
    %v181 = vunpack.c.l.b16 %v150
    %v182 = vunpack.c.l.b16 %v151
    %v183 = vunpack.c.l.b16 %v152
    %v184 = vunpack.c.l.b16 %v153
    %v185 = vunpack.c.l.b16 %v154
    %v186 = vpack.c.b16 %v175, %v174
    %v187 = vpack.c.b16 %v177, %v176
    %v188 = vpack.c.b16 %v179, %v178
    %v189 = vpack.c.b16 %v181, %v180
    %v190 = vpack.c.b16 %v183, %v182
    %v191 = vpack.c.b16 %v185, %v184
    %vm198 = vcmask 785408
    %v200 = vsel %vm198, %v142, 0
    %202 = vmatprep.subr.bf16.mxu0 0
    %203 = vmatpush1.bf16.msra.mxu0 %v186
    %204 = vmatprep.subr.bf16.mxu0 0
    %205 = vmatpush1.bf16.msra.mxu0 %v187
    %206 = vmatprep.subr.bf16.mxu0 0
    %207 = vmatpush1.bf16.msra.mxu0 %v188
    %208 = vmatprep.subr.bf16.mxu0 0
    %209 = vmatpush1.bf16.msra.mxu0 %v189
    %210 = vmatprep.subr.bf16.mxu0 0
    %211 = vmatpush1.bf16.msra.mxu0 %v190
    %212 = vmatprep.subr.bf16.mxu0 0
    %213 = vmatpush1.bf16.msra.mxu0 %v191
    %214 = vmatprep.subr.bf16.mxu0 0
    %215 = vmatpush1.bf16.msra.mxu0 0
    %216 = vmatprep.subr.bf16.mxu0 0
    %217 = vmatpush1.bf16.msra.mxu0 0
    %218 = vmatprep.subr.bf16.mxu0 0
    %219 = vmatpush1.bf16.msra.mxu0 0
    %220 = vmatprep.subr.bf16.mxu0 0
    %221 = vmatpush1.bf16.msra.mxu0 0
    %222 = vmatprep.subr.bf16.mxu0 0
    %223 = vmatpush1.bf16.msra.mxu0 0
    %224 = vmatprep.subr.bf16.mxu0 0
    %225 = vmatpush1.bf16.msra.mxu0 0
    %226 = vmatprep.subr.bf16.mxu0 0
    %227 = vmatpush1.bf16.msra.mxu0 0
    %228 = vmatprep.subr.bf16.mxu0 0
    %229 = vmatpush1.bf16.msra.mxu0 0
    %230 = vmatprep.subr.bf16.mxu0 0
    %231 = vmatpush1.bf16.msra.mxu0 0
    %232 = vmatprep.subr.bf16.mxu0 0
    %233 = vmatpush1.bf16.msra.mxu0 0
    %234 = vmatprep.mubr.bf16.mxu0 0
    %235 = vmatmul.mubr.bf16.gmra.mrb[0].mxu0 %v200
    %v236 = vpop.f32.mrb[0].mxu0
    %v237 = vadd.f32 %v160, %v236
    %v238 = vpop.f32.mrb[0].mxu0
    %v239 = vpop.f32.mrb[0].mxu0
    %v240 = vpop.f32.mrb[0].mxu0
    %241 = vdwg.mxu0
    %v242 = vmax.f32 %v237, 0.0
    %v243 = vpack.c.bf16 %v242, %v242
    %v244 = vld [vmem:[#allocation8] sm:$0xf]
    %v245 = vld [vmem:[#allocation8 + $0x4] sm:$0xf]
    %v246 = vld [vmem:[#allocation8 + $0x8] sm:$0xf]
    %v247 = vld [vmem:[#allocation8 + $0xc] sm:$0xf]
    %v248 = vld [vmem:[#allocation8 + $0x10] sm:$0xf]
    %v249 = vld [vmem:[#allocation8 + $0x14] sm:$0xf]
    %v250 = vld [vmem:[#allocation8 + $0x18] sm:$0xf]
    %v251 = vld [vmem:[#allocation8 + $0x1c] sm:$0xf]
    %v252 = vld [vmem:[#allocation8 + $0x20] sm:$0xf]
    %v253 = vld [vmem:[#allocation8 + $0x24] sm:$0xf]
    %v254 = vld [vmem:[#allocation8 + $0x28] sm:$0xf]
    %v255 = vld [vmem:[#allocation8 + $0x2c] sm:$0xf]
    %v256 = vld [vmem:[%s6] sm:$0x1]
    %v258 = vlaneseq
    %v259 = vshrl.u32 %v258, 7
    %v260 = vsub.s32 0, %v259
    %v261 = vrot.slane %v256, %v260
    %v275 = vunpack.c.l.b16 %v244
    %v276 = vunpack.c.l.b16 %v245
    %v277 = vunpack.c.l.b16 %v246
    %v278 = vunpack.c.l.b16 %v247
    %v279 = vunpack.c.l.b16 %v248
    %v280 = vunpack.c.l.b16 %v249
    %v281 = vunpack.c.l.b16 %v250
    %v282 = vunpack.c.l.b16 %v251
    %v283 = vunpack.c.l.b16 %v252
    %v284 = vunpack.c.l.b16 %v253
    %v285 = vunpack.c.l.b16 %v254
    %v286 = vunpack.c.l.b16 %v255
    %v287 = vpack.c.b16 %v276, %v275
    %v288 = vpack.c.b16 %v278, %v277
    %v289 = vpack.c.b16 %v280, %v279
    %v290 = vpack.c.b16 %v282, %v281
    %v291 = vpack.c.b16 %v284, %v283
    %v292 = vpack.c.b16 %v286, %v285
    %v300 = vsel %vm198, %v243, 0
    %302 = vmatprep.subr.bf16.mxu0 0
    %303 = vmatpush1.bf16.msra.mxu0 %v287
    %304 = vmatprep.subr.bf16.mxu0 0
    %305 = vmatpush1.bf16.msra.mxu0 %v288
    %306 = vmatprep.subr.bf16.mxu0 0
    %307 = vmatpush1.bf16.msra.mxu0 %v289
    %308 = vmatprep.subr.bf16.mxu0 0
    %309 = vmatpush1.bf16.msra.mxu0 %v290
    %310 = vmatprep.subr.bf16.mxu0 0
    %311 = vmatpush1.bf16.msra.mxu0 %v291
    %312 = vmatprep.subr.bf16.mxu0 0
    %313 = vmatpush1.bf16.msra.mxu0 %v292
    %314 = vmatprep.subr.bf16.mxu0 0
    %315 = vmatpush1.bf16.msra.mxu0 0
    %316 = vmatprep.subr.bf16.mxu0 0
    %317 = vmatpush1.bf16.msra.mxu0 0
    %318 = vmatprep.subr.bf16.mxu0 0
    %319 = vmatpush1.bf16.msra.mxu0 0
    %320 = vmatprep.subr.bf16.mxu0 0
    %321 = vmatpush1.bf16.msra.mxu0 0
    %322 = vmatprep.subr.bf16.mxu0 0
    %323 = vmatpush1.bf16.msra.mxu0 0
    %324 = vmatprep.subr.bf16.mxu0 0
    %325 = vmatpush1.bf16.msra.mxu0 0
    %326 = vmatprep.subr.bf16.mxu0 0
    %327 = vmatpush1.bf16.msra.mxu0 0
    %328 = vmatprep.subr.bf16.mxu0 0
    %329 = vmatpush1.bf16.msra.mxu0 0
    %330 = vmatprep.subr.bf16.mxu0 0
    %331 = vmatpush1.bf16.msra.mxu0 0
    %332 = vmatprep.subr.bf16.mxu0 0
    %333 = vmatpush1.bf16.msra.mxu0 0
    %334 = vmatprep.mubr.bf16.mxu0 0
    %335 = vmatmul.mubr.bf16.gmra.mrb[0].mxu0 %v300
    %v336 = vpop.f32.mrb[0].mxu0
    %v337 = vadd.f32 %v261, %v336
    %v338 = vpop.f32.mrb[0].mxu0
    %v339 = vpop.f32.mrb[0].mxu0
    %v340 = vpop.f32.mrb[0].mxu0
    %341 = vdwg.mxu0
    %343 = vrot.lane.b32.xlu0 %v337, 32
    %v344 = vpop.permute.xlu0 %343
    %vm346 = vcmask 261120
    %v347 = vsel %vm346, %v141, %v344
    %348 = vst [vmem:[#allocation10] sm:$0xff] %v347
    // Predicated region
    $region46: #{tpu_custom_call.1} parent=1 // pred_check
      _
    $region47: #{tpu_custom_call.1} parent=1 // pred_check_branch
      %350 = sbr.rel (0) target = $region49
    $region48: #{tpu_custom_call.1} parent=1 // pred_region
      %s352 = ssub.s32 128, 128
      %353 = vsyncadd [#allocation4], %s352
      %s355 = sshll.u32 [#allocation10], 4
      %s356 = int_to_ptr.vmem [resolvable:$true] %s355
      %358 = dma.vmem_to_hbm [thread:$0]  %s356, 128, %s7, [#allocation4]
    $region49: #{tpu_custom_call.1} parent=1 // pred_fallthru
      _
    // Predicated region
    $region50: #{tpu_custom_call.1} parent=1 // pred_check
      _
    $region51: #{tpu_custom_call.1} parent=1 // pred_check_branch
      %360 = sbr.rel (0) target = $region53
    $region52: #{tpu_custom_call.1} parent=1 // pred_region
      %361 = dma.done [#allocation4], 128
    $region53: #{tpu_custom_call.1} parent=1 // pred_fallthru
      _
    %362 = vsyncpa [#allocation3], 1
    %363 = vsyncpa [#allocation6], 1
    %364 = vsyncpa [#allocation9], 1
    %365 = vsyncpa [#allocation4], 1

</llo_original>
